<compile_context>
chip_gen: v7x
topology: tpu7x:2x2x1
jax: 0.10.0
libtpu: 0.0.40
codegen_flags: <defaults>
</compile_context>

<pallas_src>
import jax
import jax.numpy as jnp
from jax.experimental import pallas as pl
from jax.experimental.pallas import tpu as pltpu


def _round_up(x, m):
    return ((x + m - 1) // m) * m


def _cdiv(a, b):
    return -(-a // b)


def actor_critic_kernel(x_ref,
                        w1_ref, b1_ref, w2_ref, b2_ref,
                        wh1_ref, bh1_ref, wh2_ref, bh2_ref,
                        out_ref):
    """One batch tile: fused trunk + fused heads -> narrow (TB, 8) output slab."""
    cdt = w1_ref.dtype   # matmul operand dtype (f32 or bf16)
    ewt = b1_ref.dtype   # elementwise (bias-add / tanh) dtype

    # Input stays f32 in HBM; cast to the compute dtype in-kernel (no wrapper pre-pass).
    x = x_ref[...].astype(cdt)

    # Shared trunk: Linear -> tanh, Linear -> tanh (f32 MXU accumulation throughout).
    h = jnp.tanh(jnp.dot(x, w1_ref[...],
                         preferred_element_type=jnp.float32).astype(ewt)
                 + b1_ref[...])
    h = jnp.tanh(jnp.dot(h.astype(cdt), w2_ref[...],
                         preferred_element_type=jnp.float32).astype(ewt)
                 + b2_ref[...])

    # Fused head layer 1: [Wp1 | Wv1] -> (TB, 2H), one matmul.
    hh = jnp.tanh(jnp.dot(h.astype(cdt), wh1_ref[...],
                          preferred_element_type=jnp.float32).astype(ewt)
                  + bh1_ref[...])

    # Fused head layer 2: block-diag [[Wp2, 0], [0, Wv2]] packed to only 8 columns,
    # biases folded in -> single narrow (TB, 8) store (16x less HBM write than (TB,128)).
    out = (jnp.dot(hh.astype(cdt), wh2_ref[...],
                   preferred_element_type=jnp.float32)
           + bh2_ref[...])
    out_ref[...] = out.astype(out_ref.dtype)


def actor_critic_forward(state, params, *,
                         compute_dtype=jnp.bfloat16,
                         elementwise_dtype=None,
                         batch_tile=1024):
    """state: (B, obs_size) f32.  params: dict of (in,out) weights + (1,out) biases.

    compute_dtype: MXU operand dtype (bf16 recommended on v5e/v6e/v7x, f32 for exactness).
    elementwise_dtype: dtype for bias-add/tanh (defaults to compute_dtype; pass
                       jnp.float32 on v5e, whose VPU/EUP have no bf16).
    Returns (policy (B, act_size) f32, value (B, 1) f32).
    """
    if elementwise_dtype is None:
        elementwise_dtype = compute_dtype
    f32 = jnp.float32

    B, obs_size = state.shape
    hidden = params["w1"].shape[1]
    act_size = params["wp2"].shape[1]
    out_dim = act_size + 1
    out_cols = max(8, _round_up(out_dim, 8))   # narrow, full-extent lane dim (8 here)

    # ---- Pack / fuse the two head networks (plain JAX, outside the kernel) ----
    wh1 = jnp.concatenate([params["wp1"], params["wv1"]], axis=1)        # (H, 2H)
    bh1 = jnp.concatenate([params["bp1"], params["bv1"]], axis=1)        # (1, 2H)
    wh2 = jnp.zeros((2 * hidden, out_cols), f32)                         # (2H, 8)
    wh2 = wh2.at[:hidden, :act_size].set(params["wp2"])                  # policy block
    wh2 = wh2.at[hidden:, act_size:out_dim].set(params["wv2"])           # value block
    bh2 = jnp.zeros((1, out_cols), f32)
    bh2 = bh2.at[:, :act_size].set(params["bp2"])
    bh2 = bh2.at[:, act_size:out_dim].set(params["bv2"])

    # Weights in the matmul operand dtype; layer-1/2/head-1 biases in the elementwise
    # dtype; the final bias stays f32 (added onto the f32 accumulator before the store).
    w1 = params["w1"].astype(compute_dtype)
    w2 = params["w2"].astype(compute_dtype)
    wh1 = wh1.astype(compute_dtype)
    wh2 = wh2.astype(compute_dtype)
    b1 = params["b1"].astype(elementwise_dtype)
    b2 = params["b2"].astype(elementwise_dtype)
    bh1 = bh1.astype(elementwise_dtype)
    bh2 = bh2.astype(f32)

    # ---- Batch tiling: big tiles, but keep >= 2 tiles for v7x's 2 TensorCores ----
    B8 = _round_up(B, 8)
    tb = _round_up(min(batch_tile, B8), 8)
    if B8 >= 1024 and _cdiv(B, tb) < 2:
        tb = _round_up(_cdiv(B8, 2), 8)
    grid = (_cdiv(B, tb),)

    def resident(arr):
        # Whole-array block + constant index_map -> stays VMEM-resident across grid steps.
        return pl.BlockSpec(arr.shape, lambda i: (0, 0))

    in_specs = [
        pl.BlockSpec((tb, obs_size), lambda i: (i, 0)),   # x: tiled over batch
        resident(w1), resident(b1),
        resident(w2), resident(b2),
        resident(wh1), resident(bh1),
        resident(wh2), resident(bh2),
    ]
    out_specs = pl.BlockSpec((tb, out_cols), lambda i: (i, 0))

    weight_bytes = sum(int(a.size) * a.dtype.itemsize
                       for a in (w1, b1, w2, b2, wh1, bh1, wh2, bh2))
    cost = pl.CostEstimate(
        flops=2 * B * (obs_size * hidden + hidden * hidden
                       + hidden * 2 * hidden + 2 * hidden * out_cols),
        transcendentals=4 * hidden * B,
        bytes_accessed=B * obs_size * 4 + B * out_cols * 4 + weight_bytes,
    )

    fused = pl.pallas_call(
        actor_critic_kernel,
        out_shape=jax.ShapeDtypeStruct((B, out_cols), f32),
        grid=grid,
        in_specs=in_specs,
        out_specs=out_specs,
        compiler_params=pltpu.CompilerParams(
            dimension_semantics=("parallel",)),   # batch tiles shard across TCs (v7x)
        cost_estimate=cost,
    )(state.astype(f32), w1, b1, w2, b2, wh1, bh1, wh2, bh2)

    policy = fused[:, :act_size]
    value = fused[:, act_size:out_dim]
    return policy, value


def init_params(key, obs_size=16, act_size=4, hidden=128):
    """Deterministic synthetic init.  Weights stored as (in, out) = PyTorch W.T."""
    keys = jax.random.split(key, 12)

    def lin(kw, kb, fan_in, fan_out):
        # Mimic PyTorch nn.Linear default init: U(-1/sqrt(fan_in), 1/sqrt(fan_in))
        bound = 1.0 / jnp.sqrt(jnp.float32(fan_in))
        w = jax.random.uniform(kw, (fan_in, fan_out), jnp.float32, -bound, bound)
        b = jax.random.uniform(kb, (1, fan_out), jnp.float32, -bound, bound)
        return w, b

    p = {}
    p["w1"], p["b1"] = lin(keys[0], keys[1], obs_size, hidden)
    p["w2"], p["b2"] = lin(keys[2], keys[3], hidden, hidden)
    p["wp1"], p["bp1"] = lin(keys[4], keys[5], hidden, hidden)
    p["wp2"], p["bp2"] = lin(keys[6], keys[7], hidden, act_size)
    p["wv1"], p["bv1"] = lin(keys[8], keys[9], hidden, 1 * hidden)
    p["wv2"], p["bv2"] = lin(keys[10], keys[11], hidden, 1)
    return p


def reference_forward(state, p):
    h = jnp.tanh(state @ p["w1"] + p["b1"])
    h = jnp.tanh(h @ p["w2"] + p["b2"])
    pol = jnp.tanh(h @ p["wp1"] + p["bp1"]) @ p["wp2"] + p["bp2"]
    val = jnp.tanh(h @ p["wv1"] + p["bv1"]) @ p["wv2"] + p["bv2"]
    return pol, val


if __name__ == "__main__":
    obs_size, act_size, hidden = 16, 4, 128

    key = jax.random.PRNGKey(0)
    k_state, k_params, k_big = jax.random.split(key, 3)
    params = init_params(k_params, obs_size, act_size, hidden)

    # ---- Small-batch f32 check (exact path, tight tolerance) ----
    B = 8
    state = jax.random.normal(k_state, (B, obs_size), dtype=jnp.float32)
    policy, value = actor_critic_forward(state, params, compute_dtype=jnp.float32)
    policy = jax.block_until_ready(policy)
    value = jax.block_until_ready(value)
    ref_policy, ref_value = reference_forward(state, params)
    assert policy.shape == (B, act_size) and value.shape == (B, 1)
    assert jnp.allclose(policy, ref_policy, atol=1e-5, rtol=1e-5)
    assert jnp.allclose(value, ref_value, atol=1e-5, rtol=1e-5)

    # ---- Large-batch f32 check (exercises the batch grid: 1024 -> 2 tiles of 512) ----
    Bb = 1024
    big_state = jax.random.normal(k_big, (Bb, obs_size), dtype=jnp.float32)
    bpol, bval = actor_critic_forward(big_state, params, compute_dtype=jnp.float32)
    bpol = jax.block_until_ready(bpol)
    bval = jax.block_until_ready(bval)
    rpol, rval = reference_forward(big_state, params)
    assert bpol.shape == (Bb, act_size) and bval.shape == (Bb, 1)
    assert jnp.allclose(bpol, rpol, atol=1e-4, rtol=1e-4)
    assert jnp.allclose(bval, rval, atol=1e-4, rtol=1e-4)

    # ---- Default bf16 compute path (recommended on v6e/v7x), looser tolerance ----
    bpol16, bval16 = actor_critic_forward(big_state, params)
    bpol16 = jax.block_until_ready(bpol16)
    bval16 = jax.block_until_ready(bval16)
    assert jnp.allclose(bpol16, rpol, atol=5e-2, rtol=5e-2)
    assert jnp.allclose(bval16, rval, atol=5e-2, rtol=5e-2)

    # ---- v5e-style path: bf16 matmul operands, f32 bias-add/tanh ----
    bpol5, bval5 = actor_critic_forward(big_state, params,
                                        compute_dtype=jnp.bfloat16,
                                        elementwise_dtype=jnp.float32)
    bpol5 = jax.block_until_ready(bpol5)
    bval5 = jax.block_until_ready(bval5)
    assert jnp.allclose(bpol5, rpol, atol=5e-2, rtol=5e-2)
    assert jnp.allclose(bval5, rval, atol=5e-2, rtol=5e-2)

    print("KERNEL_OK")
</pallas_src>

<mosaic_0001>
module attributes {stable_mosaic.version = 11 : i64} {
  func.func @actor_critic_kernel(%arg0: i32, %arg1: memref<8x16xf32, #tpu.memory_space<vmem>>, %arg2: memref<16x128xf32, #tpu.memory_space<vmem>>, %arg3: memref<1x128xf32, #tpu.memory_space<vmem>>, %arg4: memref<128x128xf32, #tpu.memory_space<vmem>>, %arg5: memref<1x128xf32, #tpu.memory_space<vmem>>, %arg6: memref<128x256xf32, #tpu.memory_space<vmem>>, %arg7: memref<1x256xf32, #tpu.memory_space<vmem>>, %arg8: memref<256x8xf32, #tpu.memory_space<vmem>>, %arg9: memref<1x8xf32, #tpu.memory_space<vmem>>, %arg10: memref<8x8xf32, #tpu.memory_space<vmem>>) attributes {dimension_semantics = [#tpu.dimension_semantics<parallel>], iteration_bounds = array<i64: 1>, scalar_prefetch = 0 : i64, scratch_operands = 0 : i64, tpu.core_type = #tpu.core_type<tc>, window_params = [{transform_indices = @transform_0, window_bounds = array<i64: 8, 16>}, {pipeline_mode = #tpu.pipeline_mode<synchronous>, transform_indices = @transform_1, window_bounds = array<i64: 16, 128>}, {pipeline_mode = #tpu.pipeline_mode<synchronous>, transform_indices = @transform_2, window_bounds = array<i64: 1, 128>}, {pipeline_mode = #tpu.pipeline_mode<synchronous>, transform_indices = @transform_3, window_bounds = array<i64: 128, 128>}, {pipeline_mode = #tpu.pipeline_mode<synchronous>, transform_indices = @transform_4, window_bounds = array<i64: 1, 128>}, {pipeline_mode = #tpu.pipeline_mode<synchronous>, transform_indices = @transform_5, window_bounds = array<i64: 128, 256>}, {pipeline_mode = #tpu.pipeline_mode<synchronous>, transform_indices = @transform_6, window_bounds = array<i64: 1, 256>}, {pipeline_mode = #tpu.pipeline_mode<synchronous>, transform_indices = @transform_7, window_bounds = array<i64: 256, 8>}, {pipeline_mode = #tpu.pipeline_mode<synchronous>, transform_indices = @transform_8, window_bounds = array<i64: 1, 8>}, {transform_indices = @transform_9, window_bounds = array<i64: 8, 8>}]} {
    %c0 = arith.constant 0 : index
    %c0_0 = arith.constant 0 : index
    %0 = vector.load %arg1[%c0, %c0_0] : memref<8x16xf32, #tpu.memory_space<vmem>>, vector<8x16xf32>
    %c0_1 = arith.constant 0 : index
    %c0_2 = arith.constant 0 : index
    %1 = vector.load %arg2[%c0_1, %c0_2] : memref<16x128xf32, #tpu.memory_space<vmem>>, vector<16x128xf32>
    %cst = arith.constant dense<0.000000e+00> : vector<8x128xf32>
    %2 = tpu.matmul %0, %1, %cst {dimension_numbers = #tpu.dot_dimension_numbers<[1], [0], [0], [1], [0, 0, 1, 1], [], []>} : vector<8x16xf32>, vector<16x128xf32>, vector<8x128xf32> -> vector<8x128xf32>
    %c0_3 = arith.constant 0 : index
    %c0_4 = arith.constant 0 : index
    %3 = vector.load %arg3[%c0_3, %c0_4] : memref<1x128xf32, #tpu.memory_space<vmem>>, vector<1x128xf32>
    %4 = vector.broadcast %3 : vector<1x128xf32> to vector<8x128xf32>
    %5 = arith.addf %2, %4 : vector<8x128xf32>
    %6 = math.tanh %5 : vector<8x128xf32>
    %c0_5 = arith.constant 0 : index
    %c0_6 = arith.constant 0 : index
    %7 = vector.load %arg4[%c0_5, %c0_6] : memref<128x128xf32, #tpu.memory_space<vmem>>, vector<128x128xf32>
    %cst_7 = arith.constant dense<0.000000e+00> : vector<8x128xf32>
    %8 = tpu.matmul %6, %7, %cst_7 {dimension_numbers = #tpu.dot_dimension_numbers<[1], [0], [0], [1], [0, 0, 1, 1], [], []>} : vector<8x128xf32>, vector<128x128xf32>, vector<8x128xf32> -> vector<8x128xf32>
    %c0_8 = arith.constant 0 : index
    %c0_9 = arith.constant 0 : index
    %9 = vector.load %arg5[%c0_8, %c0_9] : memref<1x128xf32, #tpu.memory_space<vmem>>, vector<1x128xf32>
    %10 = vector.broadcast %9 : vector<1x128xf32> to vector<8x128xf32>
    %11 = arith.addf %8, %10 : vector<8x128xf32>
    %12 = math.tanh %11 : vector<8x128xf32>
    %c0_10 = arith.constant 0 : index
    %c0_11 = arith.constant 0 : index
    %13 = vector.load %arg6[%c0_10, %c0_11] : memref<128x256xf32, #tpu.memory_space<vmem>>, vector<128x256xf32>
    %cst_12 = arith.constant dense<0.000000e+00> : vector<8x256xf32>
    %14 = tpu.matmul %12, %13, %cst_12 {dimension_numbers = #tpu.dot_dimension_numbers<[1], [0], [0], [1], [0, 0, 1, 1], [], []>} : vector<8x128xf32>, vector<128x256xf32>, vector<8x256xf32> -> vector<8x256xf32>
    %c0_13 = arith.constant 0 : index
    %c0_14 = arith.constant 0 : index
    %15 = vector.load %arg7[%c0_13, %c0_14] : memref<1x256xf32, #tpu.memory_space<vmem>>, vector<1x256xf32>
    %16 = vector.broadcast %15 : vector<1x256xf32> to vector<8x256xf32>
    %17 = arith.addf %14, %16 : vector<8x256xf32>
    %18 = math.tanh %17 : vector<8x256xf32>
    %c0_15 = arith.constant 0 : index
    %c0_16 = arith.constant 0 : index
    %19 = vector.load %arg8[%c0_15, %c0_16] : memref<256x8xf32, #tpu.memory_space<vmem>>, vector<256x8xf32>
    %cst_17 = arith.constant dense<0.000000e+00> : vector<8x8xf32>
    %20 = tpu.matmul %18, %19, %cst_17 {dimension_numbers = #tpu.dot_dimension_numbers<[1], [0], [0], [1], [0, 0, 1, 1], [], []>} : vector<8x256xf32>, vector<256x8xf32>, vector<8x8xf32> -> vector<8x8xf32>
    %c0_18 = arith.constant 0 : index
    %c0_19 = arith.constant 0 : index
    %21 = vector.load %arg9[%c0_18, %c0_19] : memref<1x8xf32, #tpu.memory_space<vmem>>, vector<1x8xf32>
    %22 = vector.broadcast %21 : vector<1x8xf32> to vector<8x8xf32>
    %23 = arith.addf %20, %22 : vector<8x8xf32>
    %c0_20 = arith.constant 0 : index
    %c0_21 = arith.constant 0 : index
    %24 = vector.load %arg10[%c0_20, %c0_21] : memref<8x8xf32, #tpu.memory_space<vmem>>, vector<8x8xf32>
    tpu.vector_store %arg10[%c0_20, %c0_21], %23 {strides = array<i32>} : memref<8x8xf32, #tpu.memory_space<vmem>>, vector<8x8xf32>,
    return
  }
  func.func @transform_0(%arg0: i32) -> (i32, i32) {
    %c0_i32 = arith.constant 0 : i32
    %c0_i32_0 = arith.constant 0 : i32
    return %arg0, %c0_i32 : i32, i32
  }
  func.func @transform_1(%arg0: i32) -> (i32, i32) {
    %c0_i32 = arith.constant 0 : i32
    %c0_i32_0 = arith.constant 0 : i32
    %c0_i32_1 = arith.constant 0 : i32
    return %c0_i32, %c0_i32_0 : i32, i32
  }
  func.func @transform_2(%arg0: i32) -> (i32, i32) {
    %c0_i32 = arith.constant 0 : i32
    %c0_i32_0 = arith.constant 0 : i32
    %c0_i32_1 = arith.constant 0 : i32
    return %c0_i32, %c0_i32_0 : i32, i32
  }
  func.func @transform_3(%arg0: i32) -> (i32, i32) {
    %c0_i32 = arith.constant 0 : i32
    %c0_i32_0 = arith.constant 0 : i32
    %c0_i32_1 = arith.constant 0 : i32
    return %c0_i32, %c0_i32_0 : i32, i32
  }
  func.func @transform_4(%arg0: i32) -> (i32, i32) {
    %c0_i32 = arith.constant 0 : i32
    %c0_i32_0 = arith.constant 0 : i32
    %c0_i32_1 = arith.constant 0 : i32
    return %c0_i32, %c0_i32_0 : i32, i32
  }
  func.func @transform_5(%arg0: i32) -> (i32, i32) {
    %c0_i32 = arith.constant 0 : i32
    %c0_i32_0 = arith.constant 0 : i32
    %c0_i32_1 = arith.constant 0 : i32
    return %c0_i32, %c0_i32_0 : i32, i32
  }
  func.func @transform_6(%arg0: i32) -> (i32, i32) {
    %c0_i32 = arith.constant 0 : i32
    %c0_i32_0 = arith.constant 0 : i32
    %c0_i32_1 = arith.constant 0 : i32
    return %c0_i32, %c0_i32_0 : i32, i32
  }
  func.func @transform_7(%arg0: i32) -> (i32, i32) {
    %c0_i32 = arith.constant 0 : i32
    %c0_i32_0 = arith.constant 0 : i32
    %c0_i32_1 = arith.constant 0 : i32
    return %c0_i32, %c0_i32_0 : i32, i32
  }
  func.func @transform_8(%arg0: i32) -> (i32, i32) {
    %c0_i32 = arith.constant 0 : i32
    %c0_i32_0 = arith.constant 0 : i32
    %c0_i32_1 = arith.constant 0 : i32
    return %c0_i32, %c0_i32_0 : i32, i32
  }
  func.func @transform_9(%arg0: i32) -> (i32, i32) {
    %c0_i32 = arith.constant 0 : i32
    %c0_i32_0 = arith.constant 0 : i32
    return %arg0, %c0_i32 : i32, i32
  }
}

</mosaic_0001>

<llo_original>
// kernel: tpu_custom_call.1
$region0: #{tpu_custom_call.1}
  #allocation0 [shape = 'u32[]', space=smem, size = 0x4, offset = 0x4, fixed_abs, tag = 'smem constant byte address 0x4 - core index']
  #allocation1 [shape = 'u32[144,128]{1,0:T(1,128)}', space=vmem, size = 0x12000, scoped, tag = 'internal scratch']
  %s0 = inlined_call_operand.vmem [shape: f32[8,16], index: 0, kind: input, shape index: {}]
  %s1 = inlined_call_operand.vmem [shape: f32[16,128], index: 1, kind: input, shape index: {}]
  %s2 = inlined_call_operand.hbm [shape: f32[1,128], index: 2, kind: input, shape index: {}]
  %s3 = inlined_call_operand.hbm [shape: f32[128,128], index: 3, kind: input, shape index: {}]
  %s4 = inlined_call_operand.hbm [shape: f32[1,128], index: 4, kind: input, shape index: {}]
  %s5 = inlined_call_operand.vmem [shape: f32[128,256], index: 5, kind: input, shape index: {}]
  %s6 = inlined_call_operand.vmem [shape: f32[1,256], index: 6, kind: input, shape index: {}]
  %s7 = inlined_call_operand.vmem [shape: f32[256,8], index: 7, kind: input, shape index: {}]
  %s8 = inlined_call_operand.vmem [shape: f32[1,8], index: 8, kind: input, shape index: {}]
  %s9 = inlined_call_operand.hbm [shape: f32[8,8], index: 9, kind: output, shape index: {}]
  %s10 = sld [smem:[#allocation0]]
  $region58: #{tpu_custom_call.1} parent=0
    _
  %s12 = ssub.s32 1, %s10
  %s13 = scalar_select 0, %s12, %s10
  $region1: #{tpu_custom_call.1} parent=0
    #allocation2 [shape = 'u8[512]{0}', space=vmem, size = 0x400, scoped, tag = 'input window, operand 2, single buffered']
    #allocation3 [shape = 's32[1]{0}', space=sflag, size = 0x4, scoped, tag = 'scoped memory for tpu_custom_call.1']
    #allocation4 [shape = 's32[1]{0}', space=sflag, size = 0x4, scoped, tag = 'scoped memory for tpu_custom_call.1']
    #allocation5 [shape = 'u8[65536]{0}', space=vmem, size = 0x10000, scoped, tag = 'input window, operand 3, single buffered']
    #allocation6 [shape = 's32[1]{0}', space=sflag, size = 0x4, scoped, tag = 'scoped memory for tpu_custom_call.1']
    #allocation7 [shape = 'u8[512]{0}', space=vmem, size = 0x400, scoped, tag = 'input window, operand 4, single buffered']
    #allocation8 [shape = 'u8[4096]{0}', space=vmem, size = 0x1000, scoped, tag = 'output window, operand 0, single buffered']
    %14 = vsyncpa [#allocation3], 0
    %15 = vsyncpa [#allocation6], 0
    %16 = vsyncpa [#allocation4], 0
    // Predicated region
    $region2: #{tpu_custom_call.1} parent=1 // pred_check
      _
    $region3: #{tpu_custom_call.1} parent=1 // pred_check_branch
      %18 = sbr.rel (0) target = $region5
    $region4: #{tpu_custom_call.1} parent=1 // pred_region
      _
    $region5: #{tpu_custom_call.1} parent=1 // pred_fallthru
      _
    // Predicated region
    $region6: #{tpu_custom_call.1} parent=1 // pred_check
      _
    $region7: #{tpu_custom_call.1} parent=1 // pred_check_branch
      %20 = sbr.rel (0) target = $region9
    $region8: #{tpu_custom_call.1} parent=1 // pred_region
      _
    $region9: #{tpu_custom_call.1} parent=1 // pred_fallthru
      _
    // Predicated region
    $region10: #{tpu_custom_call.1} parent=1 // pred_check
      _
    $region11: #{tpu_custom_call.1} parent=1 // pred_check_branch
      %22 = sbr.rel (0) target = $region13
    $region12: #{tpu_custom_call.1} parent=1 // pred_region
      %s24 = ssub.s32 16, 16
      %25 = vsyncadd [#allocation3], %s24
      %s27 = sshll.u32 [#allocation2], 4
      %s28 = int_to_ptr.vmem [resolvable:$true] %s27
      %30 = dma.hbm_to_vmem [thread:$0]  %s2, 16, %s28, [#allocation3]
    $region13: #{tpu_custom_call.1} parent=1 // pred_fallthru
      _
    // Predicated region
    $region14: #{tpu_custom_call.1} parent=1 // pred_check
      _
    $region15: #{tpu_custom_call.1} parent=1 // pred_check_branch
      %32 = sbr.rel (0) target = $region17
    $region16: #{tpu_custom_call.1} parent=1 // pred_region
      %s34 = ssub.s32 2048, 2048
      %35 = vsyncadd [#allocation6], %s34
      %s36 = sshll.u32 [#allocation5], 4
      %s37 = int_to_ptr.vmem [resolvable:$true] %s36
      %42 = dma.hbm_to_vmem [thread:$0]  %s3, 2048, %s37, [#allocation6], 128, 128, 8
    $region17: #{tpu_custom_call.1} parent=1 // pred_fallthru
      _
    // Predicated region
    $region18: #{tpu_custom_call.1} parent=1 // pred_check
      _
    $region19: #{tpu_custom_call.1} parent=1 // pred_check_branch
      %44 = sbr.rel (0) target = $region21
    $region20: #{tpu_custom_call.1} parent=1 // pred_region
      %s46 = ssub.s32 16, 16
      %47 = vsyncadd [#allocation6], %s46
      %s49 = sshll.u32 [#allocation7], 4
      %s50 = int_to_ptr.vmem [resolvable:$true] %s49
      %52 = dma.hbm_to_vmem [thread:$0]  %s4, 16, %s50, [#allocation6]
    $region21: #{tpu_custom_call.1} parent=1 // pred_fallthru
      _
    // Predicated region
    $region22: #{tpu_custom_call.1} parent=1 // pred_check
      _
    $region23: #{tpu_custom_call.1} parent=1 // pred_check_branch
      %54 = sbr.rel (0) target = $region25
    $region24: #{tpu_custom_call.1} parent=1 // pred_region
      _
    $region25: #{tpu_custom_call.1} parent=1 // pred_fallthru
      _
    // Predicated region
    $region26: #{tpu_custom_call.1} parent=1 // pred_check
      _
    $region27: #{tpu_custom_call.1} parent=1 // pred_check_branch
      %56 = sbr.rel (0) target = $region29
    $region28: #{tpu_custom_call.1} parent=1 // pred_region
      _
    $region29: #{tpu_custom_call.1} parent=1 // pred_fallthru
      _
    // Predicated region
    $region30: #{tpu_custom_call.1} parent=1 // pred_check
      _
    $region31: #{tpu_custom_call.1} parent=1 // pred_check_branch
      %58 = sbr.rel (0) target = $region33
    $region32: #{tpu_custom_call.1} parent=1 // pred_region
      _
    $region33: #{tpu_custom_call.1} parent=1 // pred_fallthru
      _
    // Predicated region
    $region34: #{tpu_custom_call.1} parent=1 // pred_check
      _
    $region35: #{tpu_custom_call.1} parent=1 // pred_check_branch
      %60 = sbr.rel (0) target = $region37
    $region36: #{tpu_custom_call.1} parent=1 // pred_region
      _
    $region37: #{tpu_custom_call.1} parent=1 // pred_fallthru
      _
    // Predicated region
    $region38: #{tpu_custom_call.1} parent=1 // pred_check
      _
    $region39: #{tpu_custom_call.1} parent=1 // pred_check_branch
      %62 = sbr.rel (0) target = $region41
    $region40: #{tpu_custom_call.1} parent=1 // pred_region
      %63 = dma.done [#allocation3], 16
    $region41: #{tpu_custom_call.1} parent=1 // pred_fallthru
      _
    // Predicated region
    $region42: #{tpu_custom_call.1} parent=1 // pred_check
      _
    $region43: #{tpu_custom_call.1} parent=1 // pred_check_branch
      %65 = sbr.rel (0) target = $region45
    $region44: #{tpu_custom_call.1} parent=1 // pred_region
      %66 = dma.done [#allocation6], 2048
    $region45: #{tpu_custom_call.1} parent=1 // pred_fallthru
      _
    // Predicated region
    $region46: #{tpu_custom_call.1} parent=1 // pred_check
      _
    $region47: #{tpu_custom_call.1} parent=1 // pred_check_branch
      %68 = sbr.rel (0) target = $region49
    $region48: #{tpu_custom_call.1} parent=1 // pred_region
      %69 = dma.done [#allocation6], 16
    $region49: #{tpu_custom_call.1} parent=1 // pred_fallthru
      _
    %v70 = vld [vmem:[%s0] sm:$0xff]
    %v71 = vld [vmem:[%s1] sm:$0xff]
    %v72 = vld [vmem:[%s1 + $0x8] sm:$0xff]
    %v73 = vld [vmem:[#allocation2] sm:$0x1]
    %v75 = vlaneseq
    %v76 = vshrl.u32 %v75, 7
    %v77 = vsub.s32 0, %v76
    %v78 = vrot.slane %v73, %v77
    %vm80 = vcmask 130048
    %v82 = vsel %vm80, %v70, 0
    %84 = vmatprep.subr.mxu0 0.0
    %85 = vmatpush1.msra.mxu0 %v71
    %86 = vmatprep.subr.mxu0 0.0
    %87 = vmatpush1.msra.mxu0 %v72
    %88 = vmatprep.subr.mxu0 0.0
    %89 = vmatpush1.msra.mxu0 0.0
    %90 = vmatprep.subr.mxu0 0.0
    %91 = vmatpush1.msra.mxu0 0.0
    %92 = vmatprep.subr.mxu0 0.0
    %93 = vmatpush1.msra.mxu0 0.0
    %94 = vmatprep.subr.mxu0 0.0
    %95 = vmatpush1.msra.mxu0 0.0
    %96 = vmatprep.subr.mxu0 0.0
    %97 = vmatpush1.msra.mxu0 0.0
    %98 = vmatprep.subr.mxu0 0.0
    %99 = vmatpush1.msra.mxu0 0.0
    %100 = vmatprep.subr.mxu0 0.0
    %101 = vmatpush1.msra.mxu0 0.0
    %102 = vmatprep.subr.mxu0 0.0
    %103 = vmatpush1.msra.mxu0 0.0
    %104 = vmatprep.subr.mxu0 0.0
    %105 = vmatpush1.msra.mxu0 0.0
    %106 = vmatprep.subr.mxu0 0.0
    %107 = vmatpush1.msra.mxu0 0.0
    %108 = vmatprep.subr.mxu0 0.0
    %109 = vmatpush1.msra.mxu0 0.0
    %110 = vmatprep.subr.mxu0 0.0
    %111 = vmatpush1.msra.mxu0 0.0
    %112 = vmatprep.subr.mxu0 0.0
    %113 = vmatpush1.msra.mxu0 0.0
    %114 = vmatprep.subr.mxu0 0.0
    %115 = vmatpush1.msra.mxu0 0.0
    %116 = vmatprep.subr.mxu0 0.0
    %117 = vmatpush1.msra.mxu0 0.0
    %118 = vmatprep.subr.mxu0 0.0
    %119 = vmatpush1.msra.mxu0 0.0
    %120 = vmatprep.subr.mxu0 0.0
    %121 = vmatpush1.msra.mxu0 0.0
    %122 = vmatprep.subr.mxu0 0.0
    %123 = vmatpush1.msra.mxu0 0.0
    %124 = vmatprep.subr.mxu0 0.0
    %125 = vmatpush1.msra.mxu0 0.0
    %126 = vmatprep.subr.mxu0 0.0
    %127 = vmatpush1.msra.mxu0 0.0
    %128 = vmatprep.subr.mxu0 0.0
    %129 = vmatpush1.msra.mxu0 0.0
    %130 = vmatprep.subr.mxu0 0.0
    %131 = vmatpush1.msra.mxu0 0.0
    %132 = vmatprep.subr.mxu0 0.0
    %133 = vmatpush1.msra.mxu0 0.0
    %134 = vmatprep.subr.mxu0 0.0
    %135 = vmatpush1.msra.mxu0 0.0
    %136 = vmatprep.subr.mxu0 0.0
    %137 = vmatpush1.msra.mxu0 0.0
    %138 = vmatprep.subr.mxu0 0.0
    %139 = vmatpush1.msra.mxu0 0.0
    %140 = vmatprep.subr.mxu0 0.0
    %141 = vmatpush1.msra.mxu0 0.0
    %142 = vmatprep.subr.mxu0 0.0
    %143 = vmatpush1.msra.mxu0 0.0
    %144 = vmatprep.subr.mxu0 0.0
    %145 = vmatpush1.msra.mxu0 0.0
    %146 = vmatprep.subr.mxu0 0.0
    %147 = vmatpush1.msra.mxu0 0.0
    %148 = vmatprep.mubr.f32.mxu0 0.0
    %149 = vmatmul.mubr.f32.gmra.mrb[0].mxu0 %v82
    %v150 = vpop.f32.mrb[0].mxu0
    %v151 = vadd.f32 %v78, %v150
    %v152 = vpop.f32.mrb[0].mxu0
    %153 = vdwg.mxu0
    %v154 = vtanh.pop %v151
    %v155 = vld [vmem:[#allocation5] sm:$0xff]
    %v156 = vld [vmem:[#allocation5 + $0x8] sm:$0xff]
    %v157 = vld [vmem:[#allocation5 + $0x10] sm:$0xff]
    %v158 = vld [vmem:[#allocation5 + $0x18] sm:$0xff]
    %v159 = vld [vmem:[#allocation5 + $0x20] sm:$0xff]
    %v160 = vld [vmem:[#allocation5 + $0x28] sm:$0xff]
    %v161 = vld [vmem:[#allocation5 + $0x30] sm:$0xff]
    %v162 = vld [vmem:[#allocation5 + $0x38] sm:$0xff]
    %v163 = vld [vmem:[#allocation5 + $0x40] sm:$0xff]
    %v164 = vld [vmem:[#allocation5 + $0x48] sm:$0xff]
    %v165 = vld [vmem:[#allocation5 + $0x50] sm:$0xff]
    %v166 = vld [vmem:[#allocation5 + $0x58] sm:$0xff]
    %v167 = vld [vmem:[#allocation5 + $0x60] sm:$0xff]
    %v168 = vld [vmem:[#allocation5 + $0x68] sm:$0xff]
    %v169 = vld [vmem:[#allocation5 + $0x70] sm:$0xff]
    %v170 = vld [vmem:[#allocation5 + $0x78] sm:$0xff]
    %v171 = vld [vmem:[#allocation7] sm:$0x1]
    %v173 = vlaneseq
    %v174 = vshrl.u32 %v173, 7
    %v175 = vsub.s32 0, %v174
    %v176 = vrot.slane %v171, %v175
    %178 = vmatprep.subr.mxu0 0.0
    %179 = vmatpush1.msra.mxu0 %v155
    %180 = vmatprep.subr.mxu0 0.0
    %181 = vmatpush1.msra.mxu0 %v156
    %182 = vmatprep.subr.mxu0 0.0
    %183 = vmatpush1.msra.mxu0 %v157
    %184 = vmatprep.subr.mxu0 0.0
    %185 = vmatpush1.msra.mxu0 %v158
    %186 = vmatprep.subr.mxu0 0.0
    %187 = vmatpush1.msra.mxu0 %v159
    %188 = vmatprep.subr.mxu0 0.0
    %189 = vmatpush1.msra.mxu0 %v160
    %190 = vmatprep.subr.mxu0 0.0
    %191 = vmatpush1.msra.mxu0 %v161
    %192 = vmatprep.subr.mxu0 0.0
    %193 = vmatpush1.msra.mxu0 %v162
    %194 = vmatprep.subr.mxu0 0.0
    %195 = vmatpush1.msra.mxu0 %v163
    %196 = vmatprep.subr.mxu0 0.0
    %197 = vmatpush1.msra.mxu0 %v164
    %198 = vmatprep.subr.mxu0 0.0
    %199 = vmatpush1.msra.mxu0 %v165
    %200 = vmatprep.subr.mxu0 0.0
    %201 = vmatpush1.msra.mxu0 %v166
    %202 = vmatprep.subr.mxu0 0.0
    %203 = vmatpush1.msra.mxu0 %v167
    %204 = vmatprep.subr.mxu0 0.0
    %205 = vmatpush1.msra.mxu0 %v168
    %206 = vmatprep.subr.mxu0 0.0
    %207 = vmatpush1.msra.mxu0 %v169
    %208 = vmatprep.subr.mxu0 0.0
    %209 = vmatpush1.msra.mxu0 %v170
    %210 = vmatprep.subr.mxu0 0.0
    %211 = vmatpush1.msra.mxu0 0.0
    %212 = vmatprep.subr.mxu0 0.0
    %213 = vmatpush1.msra.mxu0 0.0
    %214 = vmatprep.subr.mxu0 0.0
    %215 = vmatpush1.msra.mxu0 0.0
    %216 = vmatprep.subr.mxu0 0.0
    %217 = vmatpush1.msra.mxu0 0.0
    %218 = vmatprep.subr.mxu0 0.0
    %219 = vmatpush1.msra.mxu0 0.0
    %220 = vmatprep.subr.mxu0 0.0
    %221 = vmatpush1.msra.mxu0 0.0
    %222 = vmatprep.subr.mxu0 0.0
    %223 = vmatpush1.msra.mxu0 0.0
    %224 = vmatprep.subr.mxu0 0.0
    %225 = vmatpush1.msra.mxu0 0.0
    %226 = vmatprep.subr.mxu0 0.0
    %227 = vmatpush1.msra.mxu0 0.0
    %228 = vmatprep.subr.mxu0 0.0
    %229 = vmatpush1.msra.mxu0 0.0
    %230 = vmatprep.subr.mxu0 0.0
    %231 = vmatpush1.msra.mxu0 0.0
    %232 = vmatprep.subr.mxu0 0.0
    %233 = vmatpush1.msra.mxu0 0.0
    %234 = vmatprep.subr.mxu0 0.0
    %235 = vmatpush1.msra.mxu0 0.0
    %236 = vmatprep.subr.mxu0 0.0
    %237 = vmatpush1.msra.mxu0 0.0
    %238 = vmatprep.subr.mxu0 0.0
    %239 = vmatpush1.msra.mxu0 0.0
    %240 = vmatprep.subr.mxu0 0.0
    %241 = vmatpush1.msra.mxu0 0.0
    %242 = vmatprep.mubr.f32.mxu0 0.0
    %243 = vmatmul.mubr.f32.gmra.mrb[0].mxu0 %v154
    %v244 = vpop.f32.mrb[0].mxu0
    %v245 = vadd.f32 %v176, %v244
    %v246 = vpop.f32.mrb[0].mxu0
    %247 = vdwg.mxu0
    %v248 = vtanh.pop %v245
    %v249 = vld [vmem:[%s5] sm:$0xff]
    %v250 = vld [vmem:[%s5 + $0x8] sm:$0xff]
    %v251 = vld [vmem:[%s5 + $0x10] sm:$0xff]
    %v252 = vld [vmem:[%s5 + $0x18] sm:$0xff]
    %v253 = vld [vmem:[%s5 + $0x20] sm:$0xff]
    %v254 = vld [vmem:[%s5 + $0x28] sm:$0xff]
    %v255 = vld [vmem:[%s5 + $0x30] sm:$0xff]
    %v256 = vld [vmem:[%s5 + $0x38] sm:$0xff]
    %v257 = vld [vmem:[%s5 + $0x40] sm:$0xff]
    %v258 = vld [vmem:[%s5 + $0x48] sm:$0xff]
    %v259 = vld [vmem:[%s5 + $0x50] sm:$0xff]
    %v260 = vld [vmem:[%s5 + $0x58] sm:$0xff]
    %v261 = vld [vmem:[%s5 + $0x60] sm:$0xff]
    %v262 = vld [vmem:[%s5 + $0x68] sm:$0xff]
    %v263 = vld [vmem:[%s5 + $0x70] sm:$0xff]
    %v264 = vld [vmem:[%s5 + $0x78] sm:$0xff]
    %v265 = vld [vmem:[%s5 + $0x80] sm:$0xff]
    %v266 = vld [vmem:[%s5 + $0x88] sm:$0xff]
    %v267 = vld [vmem:[%s5 + $0x90] sm:$0xff]
    %v268 = vld [vmem:[%s5 + $0x98] sm:$0xff]
    %v269 = vld [vmem:[%s5 + $0xa0] sm:$0xff]
    %v270 = vld [vmem:[%s5 + $0xa8] sm:$0xff]
    %v271 = vld [vmem:[%s5 + $0xb0] sm:$0xff]
    %v272 = vld [vmem:[%s5 + $0xb8] sm:$0xff]
    %v273 = vld [vmem:[%s5 + $0xc0] sm:$0xff]
    %v274 = vld [vmem:[%s5 + $0xc8] sm:$0xff]
    %v275 = vld [vmem:[%s5 + $0xd0] sm:$0xff]
    %v276 = vld [vmem:[%s5 + $0xd8] sm:$0xff]
    %v277 = vld [vmem:[%s5 + $0xe0] sm:$0xff]
    %v278 = vld [vmem:[%s5 + $0xe8] sm:$0xff]
    %v279 = vld [vmem:[%s5 + $0xf0] sm:$0xff]
    %v280 = vld [vmem:[%s5 + $0xf8] sm:$0xff]
    %v281 = vld [vmem:[%s6] sm:$0x3]
    %v283 = vlaneseq
    %v284 = vshrl.u32 %v283, 7
    %v285 = vsub.s32 0, %v284
    %v286 = vrot.slane %v281, %v285
    %v287 = vlaneseq
    %v288 = vshrl.u32 %v287, 7
    %v289 = vsub.s32 1, %v288
    %v290 = vrot.slane %v281, %v289
    %293 = vmatprep.subr.mxu0 %v250
    %294 = vmatpush1.msra.mxu0 %v249
    %295 = vmatprep.subr.mxu0 %v252
    %296 = vmatpush1.msra.mxu0 %v251
    %297 = vmatprep.subr.mxu0 %v254
    %298 = vmatpush1.msra.mxu0 %v253
    %299 = vmatprep.subr.mxu0 %v256
    %300 = vmatpush1.msra.mxu0 %v255
    %301 = vmatprep.subr.mxu0 %v258
    %302 = vmatpush1.msra.mxu0 %v257
    %303 = vmatprep.subr.mxu0 %v260
    %304 = vmatpush1.msra.mxu0 %v259
    %305 = vmatprep.subr.mxu0 %v262
    %306 = vmatpush1.msra.mxu0 %v261
    %307 = vmatprep.subr.mxu0 %v264
    %308 = vmatpush1.msra.mxu0 %v263
    %309 = vmatprep.subr.mxu0 %v266
    %310 = vmatpush1.msra.mxu0 %v265
    %311 = vmatprep.subr.mxu0 %v268
    %312 = vmatpush1.msra.mxu0 %v267
    %313 = vmatprep.subr.mxu0 %v270
    %314 = vmatpush1.msra.mxu0 %v269
    %315 = vmatprep.subr.mxu0 %v272
    %316 = vmatpush1.msra.mxu0 %v271
    %317 = vmatprep.subr.mxu0 %v274
    %318 = vmatpush1.msra.mxu0 %v273
    %319 = vmatprep.subr.mxu0 %v276
    %320 = vmatpush1.msra.mxu0 %v275
    %321 = vmatprep.subr.mxu0 %v278
    %322 = vmatpush1.msra.mxu0 %v277
    %323 = vmatprep.subr.mxu0 %v280
    %324 = vmatpush1.msra.mxu0 %v279
    %325 = vmatprep.subr.mxu0 0.0
    %326 = vmatpush1.msra.mxu0 0.0
    %327 = vmatprep.subr.mxu0 0.0
    %328 = vmatpush1.msra.mxu0 0.0
    %329 = vmatprep.subr.mxu0 0.0
    %330 = vmatpush1.msra.mxu0 0.0
    %331 = vmatprep.subr.mxu0 0.0
    %332 = vmatpush1.msra.mxu0 0.0
    %333 = vmatprep.subr.mxu0 0.0
    %334 = vmatpush1.msra.mxu0 0.0
    %335 = vmatprep.subr.mxu0 0.0
    %336 = vmatpush1.msra.mxu0 0.0
    %337 = vmatprep.subr.mxu0 0.0
    %338 = vmatpush1.msra.mxu0 0.0
    %339 = vmatprep.subr.mxu0 0.0
    %340 = vmatpush1.msra.mxu0 0.0
    %341 = vmatprep.subr.mxu0 0.0
    %342 = vmatpush1.msra.mxu0 0.0
    %343 = vmatprep.subr.mxu0 0.0
    %344 = vmatpush1.msra.mxu0 0.0
    %345 = vmatprep.subr.mxu0 0.0
    %346 = vmatpush1.msra.mxu0 0.0
    %347 = vmatprep.subr.mxu0 0.0
    %348 = vmatpush1.msra.mxu0 0.0
    %349 = vmatprep.subr.mxu0 0.0
    %350 = vmatpush1.msra.mxu0 0.0
    %351 = vmatprep.subr.mxu0 0.0
    %352 = vmatpush1.msra.mxu0 0.0
    %353 = vmatprep.subr.mxu0 0.0
    %354 = vmatpush1.msra.mxu0 0.0
    %355 = vmatprep.subr.mxu0 0.0
    %356 = vmatpush1.msra.mxu0 0.0
    %357 = vmatprep.mubr.f32.mxu0 0.0
    %358 = vmatmul.mubr.f32.gmra.mrb[0].mxu0 %v248
    %v359 = vpop.f32.mrb[0].mxu0
    %v360 = vadd.f32 %v286, %v359
    %v361 = vpop.f32.mrb[0].mxu0
    %v362 = vadd.f32 %v290, %v361
    %363 = vdwg.mxu0
    %v364 = vtanh.pop %v360
    %v365 = vtanh.pop %v362
    %v366 = vld [vmem:[%s7] sm:$0xff]
    %v367 = vld [vmem:[%s7 + $0x8] sm:$0xff]
    %v368 = vld [vmem:[%s7 + $0x10] sm:$0xff]
    %v369 = vld [vmem:[%s7 + $0x18] sm:$0xff]
    %v370 = vld [vmem:[%s7 + $0x20] sm:$0xff]
    %v371 = vld [vmem:[%s7 + $0x28] sm:$0xff]
    %v372 = vld [vmem:[%s7 + $0x30] sm:$0xff]
    %v373 = vld [vmem:[%s7 + $0x38] sm:$0xff]
    %v374 = vld [vmem:[%s7 + $0x40] sm:$0xff]
    %v375 = vld [vmem:[%s7 + $0x48] sm:$0xff]
    %v376 = vld [vmem:[%s7 + $0x50] sm:$0xff]
    %v377 = vld [vmem:[%s7 + $0x58] sm:$0xff]
    %v378 = vld [vmem:[%s7 + $0x60] sm:$0xff]
    %v379 = vld [vmem:[%s7 + $0x68] sm:$0xff]
    %v380 = vld [vmem:[%s7 + $0x70] sm:$0xff]
    %v381 = vld [vmem:[%s7 + $0x78] sm:$0xff]
    %v382 = vld [vmem:[%s7 + $0x80] sm:$0xff]
    %v383 = vld [vmem:[%s7 + $0x88] sm:$0xff]
    %v384 = vld [vmem:[%s7 + $0x90] sm:$0xff]
    %v385 = vld [vmem:[%s7 + $0x98] sm:$0xff]
    %v386 = vld [vmem:[%s7 + $0xa0] sm:$0xff]
    %v387 = vld [vmem:[%s7 + $0xa8] sm:$0xff]
    %v388 = vld [vmem:[%s7 + $0xb0] sm:$0xff]
    %v389 = vld [vmem:[%s7 + $0xb8] sm:$0xff]
    %v390 = vld [vmem:[%s7 + $0xc0] sm:$0xff]
    %v391 = vld [vmem:[%s7 + $0xc8] sm:$0xff]
    %v392 = vld [vmem:[%s7 + $0xd0] sm:$0xff]
    %v393 = vld [vmem:[%s7 + $0xd8] sm:$0xff]
    %v394 = vld [vmem:[%s7 + $0xe0] sm:$0xff]
    %v395 = vld [vmem:[%s7 + $0xe8] sm:$0xff]
    %v396 = vld [vmem:[%s7 + $0xf0] sm:$0xff]
    %v397 = vld [vmem:[%s7 + $0xf8] sm:$0xff]
    %v398 = vld [vmem:[%s8] sm:$0x1]
    %v400 = vlaneseq
    %v401 = vshrl.u32 %v400, 7
    %v402 = vsub.s32 0, %v401
    %v403 = vrot.slane %v398, %v402
    %405 = vmatprep.subr.mxu0 0.0
    %406 = vmatpush1.msra.mxu0 %v366
    %407 = vmatprep.subr.mxu0 0.0
    %408 = vmatpush1.msra.mxu0 %v367
    %409 = vmatprep.subr.mxu0 0.0
    %410 = vmatpush1.msra.mxu0 %v368
    %411 = vmatprep.subr.mxu0 0.0
    %412 = vmatpush1.msra.mxu0 %v369
    %413 = vmatprep.subr.mxu0 0.0
    %414 = vmatpush1.msra.mxu0 %v370
    %415 = vmatprep.subr.mxu0 0.0
    %416 = vmatpush1.msra.mxu0 %v371
    %417 = vmatprep.subr.mxu0 0.0
    %418 = vmatpush1.msra.mxu0 %v372
    %419 = vmatprep.subr.mxu0 0.0
    %420 = vmatpush1.msra.mxu0 %v373
    %421 = vmatprep.subr.mxu0 0.0
    %422 = vmatpush1.msra.mxu0 %v374
    %423 = vmatprep.subr.mxu0 0.0
    %424 = vmatpush1.msra.mxu0 %v375
    %425 = vmatprep.subr.mxu0 0.0
    %426 = vmatpush1.msra.mxu0 %v376
    %427 = vmatprep.subr.mxu0 0.0
    %428 = vmatpush1.msra.mxu0 %v377
    %429 = vmatprep.subr.mxu0 0.0
    %430 = vmatpush1.msra.mxu0 %v378
    %431 = vmatprep.subr.mxu0 0.0
    %432 = vmatpush1.msra.mxu0 %v379
    %433 = vmatprep.subr.mxu0 0.0
    %434 = vmatpush1.msra.mxu0 %v380
    %435 = vmatprep.subr.mxu0 0.0
    %436 = vmatpush1.msra.mxu0 %v381
    %437 = vmatprep.subr.mxu0 0.0
    %438 = vmatpush1.msra.mxu0 %v382
    %439 = vmatprep.subr.mxu0 0.0
    %440 = vmatpush1.msra.mxu0 %v383
    %441 = vmatprep.subr.mxu0 0.0
    %442 = vmatpush1.msra.mxu0 %v384
    %443 = vmatprep.subr.mxu0 0.0
    %444 = vmatpush1.msra.mxu0 %v385
    %445 = vmatprep.subr.mxu0 0.0
    %446 = vmatpush1.msra.mxu0 %v386
    %447 = vmatprep.subr.mxu0 0.0
    %448 = vmatpush1.msra.mxu0 %v387
    %449 = vmatprep.subr.mxu0 0.0
    %450 = vmatpush1.msra.mxu0 %v388
    %451 = vmatprep.subr.mxu0 0.0
    %452 = vmatpush1.msra.mxu0 %v389
    %453 = vmatprep.subr.mxu0 0.0
    %454 = vmatpush1.msra.mxu0 %v390
    %455 = vmatprep.subr.mxu0 0.0
    %456 = vmatpush1.msra.mxu0 %v391
    %457 = vmatprep.subr.mxu0 0.0
    %458 = vmatpush1.msra.mxu0 %v392
    %459 = vmatprep.subr.mxu0 0.0
    %460 = vmatpush1.msra.mxu0 %v393
    %461 = vmatprep.subr.mxu0 0.0
    %462 = vmatpush1.msra.mxu0 %v394
    %463 = vmatprep.subr.mxu0 0.0
    %464 = vmatpush1.msra.mxu0 %v395
    %465 = vmatprep.subr.mxu0 0.0
    %466 = vmatpush1.msra.mxu0 %v396
    %467 = vmatprep.subr.mxu0 0.0
    %468 = vmatpush1.msra.mxu0 %v397
    %469 = vmatprep.mubr.f32.mxu0 %v365
    %470 = vmatmul.mubr.f32.gmra.mrb[0].mxu0 %v364
    %v471 = vpop.f32.mrb[0].mxu0
    %v472 = vadd.f32 %v403, %v471
    %v473 = vpop.f32.mrb[0].mxu0
    %474 = vdwg.mxu0
    %vm475 = vcmask 64512
    %476 = vst.msk [vmem:[#allocation8] sm:$0xff] %vm475, %v472
    // Predicated region
    $region50: #{tpu_custom_call.1} parent=1 // pred_check
      _
    $region51: #{tpu_custom_call.1} parent=1 // pred_check_branch
      %478 = sbr.rel (0) target = $region53
    $region52: #{tpu_custom_call.1} parent=1 // pred_region
      %s480 = ssub.s32 128, 128
      %481 = vsyncadd [#allocation4], %s480
      %s483 = sshll.u32 [#allocation8], 4
      %s484 = int_to_ptr.vmem [resolvable:$true] %s483
      %486 = dma.vmem_to_hbm [thread:$0]  %s484, 128, %s9, [#allocation4]
    $region53: #{tpu_custom_call.1} parent=1 // pred_fallthru
      _
    // Predicated region
    $region54: #{tpu_custom_call.1} parent=1 // pred_check
      _
    $region55: #{tpu_custom_call.1} parent=1 // pred_check_branch
      %488 = sbr.rel (0) target = $region57
    $region56: #{tpu_custom_call.1} parent=1 // pred_region
      %489 = dma.done [#allocation4], 128
    $region57: #{tpu_custom_call.1} parent=1 // pred_fallthru
      _
    %490 = vsyncpa [#allocation3], 1
    %491 = vsyncpa [#allocation6], 1
    %492 = vsyncpa [#allocation4], 1

</llo_original>
